<compile_context>
chip_gen: v7x
topology: tpu7x:2x2x1
jax: 0.10.0
libtpu: 0.0.40
codegen_flags: <defaults>
</compile_context>

<pallas_src>
import math
import numpy as np
import jax
import jax.numpy as jnp
from jax import lax
from jax.experimental import pallas as pl
from jax.experimental.pallas import tpu as pltpu


# ---------------------------------------------------------------------------
# VMEM budgeting (generation aware: v5e/v6e have 128 MiB physical VMEM, v7x 64 MiB)
# ---------------------------------------------------------------------------
def _vmem_params():
    cap = None
    try:
        cap = int(pltpu.get_tpu_info().vmem_capacity_bytes)
    except Exception:
        cap = None
    if cap is None:
        cap = 64 * 1024 * 1024                       # assume the smaller (v7x-like) VMEM
    if cap >= 96 * 1024 * 1024:                      # v5e / v6e (128 MiB physical)
        return 96 * 1024 * 1024, 40 * 1024 * 1024
    return 48 * 1024 * 1024, 20 * 1024 * 1024        # v7x (64 MiB) / unknown


_VMEM_LIMIT_BYTES, _WORKING_SET_BUDGET = _vmem_params()


def _pick_h_block(H, B, per_head_bytes, fixed_bytes, budget=_WORKING_SET_BUDGET):
    """Largest divisor of H whose estimated per-step VMEM footprint fits `budget`;
    prefer divisors that keep the (B * H/H_blk) grid >= 2 (dual-TC v7x)."""
    fits = [hb for hb in range(1, H + 1)
            if H % hb == 0 and fixed_bytes + hb * per_head_bytes <= budget]
    if not fits:
        return 1
    pref = [hb for hb in fits if B * (H // hb) >= 2]
    return max(pref) if pref else max(fits)


def _pick_k_tile(L_K, cap=512):
    """Largest multiple-of-128 divisor of L_K that is <= cap (L_K streaming tile);
    falls back to the full L_K (single tile) when no such divisor exists."""
    best = None
    t = 128
    while t <= min(L_K, cap):
        if L_K % t == 0:
            best = t
        t += 128
    return best if best is not None else L_K


def _pick_chunk(L, cap=512):
    """Chunk size for the blocked causal cumsum: largest divisor of L <= cap."""
    best = 1
    for t in range(1, min(L, cap) + 1):
        if L % t == 0:
            best = t
    if best < 64 and best != L:
        return L                                     # avoid many tiny chunks
    return best


# ---------------------------------------------------------------------------
# Kernel 1: sparsity measure  M[l] = max_s(Q[l].K_sample[l,s]) - sum_s(...)/L_K
# L_K is streamed over a reduction grid axis; the duplicate-weighted sample sum
# is computed on the MXU as q . (counts @ K_tile).
# ---------------------------------------------------------------------------
def _make_m_kernel(H_blk, L_K):
    inv_lk = 1.0 / float(L_K)
    NEG = -1e30

    def m_kernel(q_ref, k_ref, c_ref, m_ref, mx_acc, sm_acc):
        kt = pl.program_id(2)

        @pl.when(kt == 0)
        def _():
            mx_acc[...] = jnp.full_like(mx_acc, NEG)
            sm_acc[...] = jnp.zeros_like(sm_acc)

        q = q_ref[...]                                    # (H_blk, L_Q, D)      bf16
        k = k_ref[...]                                    # (H_blk, tile_k, D)   bf16
        c = c_ref[...]                                    # (L_Q, tile_k)        bf16 counts

        # scores of this key tile (MXU, f32 accumulate)
        s = lax.dot_general(q, k, (((2,), (2,)), ((0,), (0,))),
                            preferred_element_type=jnp.float32)   # (H_blk, L_Q, tile_k)
        sampled = (c > 0)[None, :, :]
        mx_tile = jnp.max(jnp.where(sampled, s, NEG), axis=-1)    # (H_blk, L_Q)
        mx_acc[...] = jnp.maximum(mx_acc[...], mx_tile)

        # duplicate-weighted sum over sampled keys on the MXU:
        #   sum_s (q . k_sample_s) = q . (counts @ K_tile)
        ck = [jnp.dot(c, k[h], preferred_element_type=jnp.float32)[None]
              for h in range(H_blk)]                               # H_blk x (1, L_Q, D)
        ck = ck[0] if H_blk == 1 else jnp.concatenate(ck, axis=0)  # (H_blk, L_Q, D)
        sm_acc[...] += jnp.sum(q.astype(jnp.float32) * ck, axis=-1)

        @pl.when(kt == pl.num_programs(2) - 1)
        def _():
            m_ref[...] = mx_acc[...] - sm_acc[...] * inv_lk

    return m_kernel


def _sparsity_measure(Q, K, counts):
    B, H, L_Q, D = Q.shape
    L_K = K.shape[2]
    tile_k = _pick_k_tile(L_K)
    nKt = L_K // tile_k

    per_head = (4 * L_Q * D            # q bf16 (resident across kt, keep slack)
                + 4 * tile_k * D       # k bf16 tile, double buffered
                + 8 * L_Q * tile_k     # f32 score tile + select temporaries
                + 8 * L_Q * D          # f32 counts@K tile
                + 24 * L_Q)            # accumulators + output
    fixed = 4 * L_Q * tile_k           # sample-count tile (double buffered)
    H_blk = _pick_h_block(H, B, per_head, fixed)
    nHb = H // H_blk

    Qr = Q.reshape(B, nHb, H_blk, L_Q, D)
    Kr = K.reshape(B, nHb, H_blk, L_K, D)

    out = pl.pallas_call(
        _make_m_kernel(H_blk, L_K),
        out_shape=jax.ShapeDtypeStruct((B, nHb, H_blk, L_Q), jnp.float32),
        grid=(B, nHb, nKt),
        in_specs=[
            pl.BlockSpec((None, None, H_blk, L_Q, D), lambda b, hb, kt: (b, hb, 0, 0, 0)),
            pl.BlockSpec((None, None, H_blk, tile_k, D), lambda b, hb, kt: (b, hb, 0, kt, 0)),
            pl.BlockSpec((L_Q, tile_k), lambda b, hb, kt: (0, kt)),
        ],
        out_specs=pl.BlockSpec((None, None, H_blk, L_Q), lambda b, hb, kt: (b, hb, 0, 0)),
        scratch_shapes=[pltpu.VMEM((H_blk, L_Q), jnp.float32),
                        pltpu.VMEM((H_blk, L_Q), jnp.float32)],
        compiler_params=pltpu.CompilerParams(
            dimension_semantics=("parallel", "parallel", "arbitrary"),
            vmem_limit_bytes=_VMEM_LIMIT_BYTES),
    )(Qr, Kr, counts)
    return out.reshape(B, H, L_Q)                          # (B, H, L_Q), lane = L_Q


# ---------------------------------------------------------------------------
# Kernel 2: per-(b, head-block) sparse attention + initial context + scatter.
# Output is a lane-dense (L_Q, H_blk*D) slab per grid step.
# ---------------------------------------------------------------------------
def _make_attn_kernel(H_blk, u, L_Q, L_K, L_V, D, scale, mask_flag, chunk):
    N = H_blk * D
    NEG = -1e30
    n_chunks = L_V // chunk

    def kernel(qr_ref, k_ref, vflat_ref, idx_ref, ctx_ref):
        vflat = vflat_ref[...]                            # (L_V, N) bf16

        # ---- initial context, written straight into the lane-dense output block ----
        if mask_flag:
            # causal inclusive cumsum over rows: per-chunk tril matmul + running carry
            r = lax.broadcasted_iota(jnp.int32, (chunk, chunk), 0)
            cc = lax.broadcasted_iota(jnp.int32, (chunk, chunk), 1)
            tril_c = (r >= cc).astype(jnp.bfloat16)       # (chunk, chunk)
            carry = jnp.zeros((1, N), jnp.float32)
            for c in range(n_chunks):
                v_c = vflat[c * chunk:(c + 1) * chunk, :]
                part = jnp.dot(tril_c, v_c, preferred_element_type=jnp.float32)
                ctx_ref[c * chunk:(c + 1) * chunk, :] = part + carry
                if c + 1 < n_chunks:
                    carry = carry + jnp.sum(v_c.astype(jnp.float32), axis=0, keepdims=True)
        else:
            vmean = jnp.mean(vflat.astype(jnp.float32), axis=0, keepdims=True)
            ctx_ref[...] = jnp.broadcast_to(vmean, (L_Q, N))

        # ---- head-batched sparse attention: scores, ProbMask, softmax ----
        qr = qr_ref[...]                                  # (H_blk, u, D)   bf16
        k = k_ref[...]                                    # (H_blk, L_K, D) bf16
        idx = idx_ref[...]                                # (H_blk, u)      int32
        s = lax.dot_general(qr, k, (((2,), (2,)), ((0,), (0,))),
                            preferred_element_type=jnp.float32) * scale   # (H_blk, u, L_K)
        if mask_flag:
            # ProbMask(j > index[i]) -> keep j <= index[i]   (VPU iota compare, no matmul)
            j = lax.broadcasted_iota(jnp.int32, (H_blk, u, L_K), 2)
            s = jnp.where(j <= idx[:, :, None], s, NEG)
        m = jnp.max(s, axis=-1, keepdims=True)
        e = jnp.exp(s - m)
        attn = (e / jnp.sum(e, axis=-1, keepdims=True)).astype(jnp.bfloat16)  # (H_blk,u,L_K)

        # ---- per-head attn @ V + one-hot scatter into the output lane slice ----
        q_rows = lax.broadcasted_iota(jnp.int32, (L_Q, u), 0)
        for h in range(H_blk):                            # static, small head loop
            v_h = vflat[:, h * D:(h + 1) * D]             # (L_V, D) bf16
            out_h = jnp.dot(attn[h], v_h, preferred_element_type=jnp.float32)  # (u, D)
            onehot = (q_rows == idx[h:h + 1, :]).astype(jnp.float32)           # (L_Q, u)
            # vectorized scatter: context[index[i], :] = out[i, :]
            scat = jnp.dot(onehot, out_h, preferred_element_type=jnp.float32)  # (L_Q, D)
            row_sel = jnp.sum(onehot, axis=-1, keepdims=True) > 0.5            # (L_Q, 1)
            cur = ctx_ref[:, h * D:(h + 1) * D]
            ctx_ref[:, h * D:(h + 1) * D] = jnp.where(row_sel, scat, cur)

    return kernel


def _attention_context(Q_reduce, K, V_native, index, L_Q, scale, mask_flag):
    B, H, u, D = Q_reduce.shape
    L_K = K.shape[2]
    L_V = V_native.shape[1]
    assert L_K == L_V
    if mask_flag:
        assert L_Q == L_V, "mask_flag=True requires L_Q == L_V (as in the PyTorch code)"

    chunk = _pick_chunk(L_V) if mask_flag else L_V

    per_head = (4 * u * D + 4 * L_K * D + 2 * L_V * D     # q/k/v streams (double-buffered)
                + 14 * u * L_K                            # f32 scores / exp / attn
                + 8 * L_Q * u                             # one-hot scatter operand
                + 12 * L_Q * D                            # output block (+ headroom)
                + 8 * chunk * D)                          # cumsum chunk temporaries
    fixed = 2 * chunk * chunk + 16 * chunk                # in-kernel tril chunk + carry
    H_blk = _pick_h_block(H, B, per_head, fixed)
    nHb = H // H_blk

    QRr = Q_reduce.reshape(B, nHb, H_blk, u, D)
    Kr = K.reshape(B, nHb, H_blk, L_K, D)
    # V as a lane-dense (L_V, H_blk*D) slab per grid step, built directly from the
    # native (B, L_V, H, D) layout (single fused cast+transpose pass).
    Vf = V_native.reshape(B, L_V, nHb, H_blk * D).transpose(0, 2, 1, 3)
    idxr = index.astype(jnp.int32).reshape(B, nHb, H_blk, u)

    slab = pl.pallas_call(
        _make_attn_kernel(H_blk, u, L_Q, L_K, L_V, D, scale, mask_flag, chunk),
        out_shape=jax.ShapeDtypeStruct((B, nHb, L_Q, H_blk * D), jnp.float32),
        grid=(B, nHb),
        in_specs=[
            pl.BlockSpec((None, None, H_blk, u, D), lambda b, hb: (b, hb, 0, 0, 0)),
            pl.BlockSpec((None, None, H_blk, L_K, D), lambda b, hb: (b, hb, 0, 0, 0)),
            pl.BlockSpec((None, None, L_V, H_blk * D), lambda b, hb: (b, hb, 0, 0)),
            pl.BlockSpec((None, None, H_blk, u), lambda b, hb: (b, hb, 0, 0)),
        ],
        out_specs=pl.BlockSpec((None, None, L_Q, H_blk * D), lambda b, hb: (b, hb, 0, 0)),
        compiler_params=pltpu.CompilerParams(
            dimension_semantics=("parallel", "parallel"),
            vmem_limit_bytes=_VMEM_LIMIT_BYTES),
    )(QRr, Kr, Vf, idxr)

    # (B, nHb, L_Q, H_blk*D) -> (B, L_Q, H, D)   (layout plumbing in the wrapper)
    return (slab.reshape(B, nHb, L_Q, H_blk, D)
                .transpose(0, 2, 1, 3, 4)
                .reshape(B, L_Q, H, D))


# ---------------------------------------------------------------------------
# ProbAttention.forward  (layer_num != 0 path)
# ---------------------------------------------------------------------------
def prob_attention_forward(queries, keys, values, atten_data, attn_mask, *,
                           layer_num=1, factor=5, scale=None, mask_flag=True,
                           output_attention=False, sample_key=None):
    B, L_Q, H, D = queries.shape
    _, L_K, _, _ = keys.shape

    U_part = factor * int(np.ceil(np.log(L_K)))
    u = factor * int(np.ceil(np.log(L_Q)))
    U_part = min(U_part, L_K)
    u = min(u, L_Q)

    if layer_num == 0:
        # TODO(synk): layer_num==0 path (_sort_importance) needs data-dependent full sorting,
        # in-place min-shift normalisation loops and a freshly-sampled nn.Parameter each call;
        # no clean Pallas equivalent, not implemented.
        raise NotImplementedError("layer_num == 0 branch not implemented")
    if output_attention:
        # TODO(synk): output_attention=True (dense (B,H,L_V,L_V) attention map) not implemented.
        raise NotImplementedError("output_attention=True not implemented")

    # head-major (B, H, L, D) bf16 matmul streams for Q/K (cast fuses into the transpose copy);
    # V stays in its native (B, L, H, D) layout and is re-sliced by the kernel-2 BlockSpecs.
    Q = jnp.transpose(queries, (0, 2, 1, 3)).astype(jnp.bfloat16)
    K = jnp.transpose(keys, (0, 2, 1, 3)).astype(jnp.bfloat16)
    Vn = values.astype(jnp.bfloat16)

    if sample_key is None:
        sample_key = jax.random.PRNGKey(0)
    # torch.randint key sampling -> deterministic jax.random.  Instead of materialising
    # K_sample in HBM, build a small (L_Q, L_K) sample-count matrix (duplicates counted).
    sample_idx = jax.random.randint(sample_key, (L_Q, U_part), 0, L_K)
    rows = jnp.arange(L_Q)[:, None]
    counts = jnp.zeros((L_Q, L_K), jnp.float32).at[rows, sample_idx].add(1.0)
    counts = counts.astype(jnp.bfloat16)                  # counts <= U_part << 256: exact

    M = _sparsity_measure(Q, K, counts)                   # (B, H, L_Q)         [Pallas]
    _, index = jax.lax.top_k(M, u)                        # (B, H, u)
    Q_reduce = jnp.take_along_axis(Q, index[..., None], axis=2)   # (B, H, u, D)

    scl = scale if scale is not None else 1.0 / math.sqrt(D)
    context = _attention_context(Q_reduce, K, Vn, index, L_Q, scl, mask_flag)   # [Pallas]

    attn = None  # output_attention=False; dropout is declared but never applied in forward
    return context, attn                                  # (B, L_Q, H, D)


if __name__ == "__main__":
    key = jax.random.PRNGKey(0)
    kq, kk, kv, ka, ks = jax.random.split(key, 5)

    B, L, H, D = 2, 16, 4, 32                             # small, L_Q = L_K = L_V = L
    queries = jax.random.normal(kq, (B, L, H, D), dtype=jnp.float32)
    keys = jax.random.normal(kk, (B, L, H, D), dtype=jnp.float32)
    values = jax.random.normal(kv, (B, L, H, D), dtype=jnp.float32)
    atten_data = jax.random.normal(ka, (B, L, 2), dtype=jnp.float32)  # unused (layer_num != 0)

    context, attn = prob_attention_forward(
        queries, keys, values, atten_data, None,
        layer_num=1, factor=2, scale=None, mask_flag=True,
        output_attention=False, sample_key=ks)

    jax.block_until_ready(context)
    assert context.shape == (B, L, H, D)
    assert context.dtype == jnp.float32
    assert bool(jnp.all(jnp.isfinite(context)))
    assert attn is None
    print("KERNEL_OK")
</pallas_src>

<mosaic_0001>
module attributes {stable_mosaic.version = 11 : i64} {
  func.func @m_kernel(%arg0: i32, %arg1: i32, %arg2: i32, %arg3: memref<1x1x4x16x32xbf16, #tpu.memory_space<vmem>>, %arg4: memref<1x1x4x16x32xbf16, #tpu.memory_space<vmem>>, %arg5: memref<16x16xbf16, #tpu.memory_space<vmem>>, %arg6: memref<1x1x4x16xf32, #tpu.memory_space<vmem>>, %arg7: memref<4x16xf32, #tpu.memory_space<vmem>>, %arg8: memref<4x16xf32, #tpu.memory_space<vmem>>) attributes {dimension_semantics = [#tpu.dimension_semantics<parallel>, #tpu.dimension_semantics<parallel>, #tpu.dimension_semantics<arbitrary>], iteration_bounds = array<i64: 2, 1, 1>, scalar_prefetch = 0 : i64, scratch_operands = 2 : i64, tpu.core_type = #tpu.core_type<tc>, window_params = [{transform_indices = @transform_0, window_bounds = array<i64: 1, 1, 4, 16, 32>}, {transform_indices = @transform_1, window_bounds = array<i64: 1, 1, 4, 16, 32>}, {transform_indices = @transform_2, window_bounds = array<i64: 16, 16>}, {transform_indices = @transform_3, window_bounds = array<i64: 1, 1, 4, 16>}]} {
    %c0_i32 = arith.constant 0 : i32
    %0 = arith.cmpi eq, %arg2, %c0_i32 : i32
    %1 = arith.extui %0 : i1 to i32
    %c0_i32_0 = arith.constant 0 : i32
    %2 = arith.cmpi ne, %1, %c0_i32_0 : i32
    scf.if %2 {
      %cst_30 = arith.constant -1.000000e+30 : f32
      %46 = vector.broadcast %cst_30 : f32 to vector<4x16xf32>
      %c0_31 = arith.constant 0 : index
      %c0_32 = arith.constant 0 : index
      %47 = vector.load %arg7[%c0_31, %c0_32] : memref<4x16xf32, #tpu.memory_space<vmem>>, vector<4x16xf32>
      tpu.vector_store %arg7[%c0_31, %c0_32], %46 {strides = array<i32>} : memref<4x16xf32, #tpu.memory_space<vmem>>, vector<4x16xf32>,
      %cst_33 = arith.constant 0.000000e+00 : f32
      %48 = vector.broadcast %cst_33 : f32 to vector<4x16xf32>
      %c0_34 = arith.constant 0 : index
      %c0_35 = arith.constant 0 : index
      %49 = vector.load %arg8[%c0_34, %c0_35] : memref<4x16xf32, #tpu.memory_space<vmem>>, vector<4x16xf32>
      tpu.vector_store %arg8[%c0_34, %c0_35], %48 {strides = array<i32>} : memref<4x16xf32, #tpu.memory_space<vmem>>, vector<4x16xf32>,
    } else {
    }
    %c0 = arith.constant 0 : index
    %c0_1 = arith.constant 0 : index
    %c0_2 = arith.constant 0 : index
    %c0_3 = arith.constant 0 : index
    %c0_4 = arith.constant 0 : index
    %3 = vector.load %arg3[%c0, %c0_1, %c0_2, %c0_3, %c0_4] : memref<1x1x4x16x32xbf16, #tpu.memory_space<vmem>>, vector<1x1x4x16x32xbf16>
    %4 = vector.shape_cast %3 : vector<1x1x4x16x32xbf16> to vector<4x16x32xbf16>
    %c0_5 = arith.constant 0 : index
    %c0_6 = arith.constant 0 : index
    %c0_7 = arith.constant 0 : index
    %c0_8 = arith.constant 0 : index
    %c0_9 = arith.constant 0 : index
    %5 = vector.load %arg4[%c0_5, %c0_6, %c0_7, %c0_8, %c0_9] : memref<1x1x4x16x32xbf16, #tpu.memory_space<vmem>>, vector<1x1x4x16x32xbf16>
    %6 = vector.shape_cast %5 : vector<1x1x4x16x32xbf16> to vector<4x16x32xbf16>
    %c0_10 = arith.constant 0 : index
    %c0_11 = arith.constant 0 : index
    %7 = vector.load %arg5[%c0_10, %c0_11] : memref<16x16xbf16, #tpu.memory_space<vmem>>, vector<16x16xbf16>
    %cst = arith.constant dense<0.000000e+00> : vector<4x16x16xf32>
    %8 = tpu.matmul %4, %6, %cst {dimension_numbers = #tpu.dot_dimension_numbers<[2], [2], [1], [1], [0, 0, 0, 1, 1, 1], [0], [0]>} : vector<4x16x32xbf16>, vector<4x16x32xbf16>, vector<4x16x16xf32> -> vector<4x16x16xf32>
    %cst_12 = arith.constant 0.000000e+00 : bf16
    %9 = vector.broadcast %cst_12 : bf16 to vector<16x16xbf16>
    %10 = arith.cmpf ogt, %7, %9 : vector<16x16xbf16>
    %11 = vector.shape_cast %10 : vector<16x16xi1> to vector<1x16x16xi1>
    %cst_13 = arith.constant -1.000000e+30 : f32
    %12 = vector.shape_cast %11 : vector<1x16x16xi1> to vector<1x16x16xi1>
    %13 = vector.broadcast %12 : vector<1x16x16xi1> to vector<4x16x16xi1>
    %14 = vector.broadcast %cst_13 : f32 to vector<4x16x16xf32>
    %15 = arith.select %13, %8, %14 : vector<4x16x16xi1>, vector<4x16x16xf32>
    %cst_14 = arith.constant dense<0xFF800000> : vector<4x16xf32>
    %16 = vector.multi_reduction <maximumf>, %15, %cst_14 [2] : vector<4x16x16xf32> to vector<4x16xf32>
    %c0_15 = arith.constant 0 : index
    %c0_16 = arith.constant 0 : index
    %17 = vector.load %arg7[%c0_15, %c0_16] : memref<4x16xf32, #tpu.memory_space<vmem>>, vector<4x16xf32>
    %18 = arith.maximumf %17, %16 : vector<4x16xf32>
    %c0_17 = arith.constant 0 : index
    %c0_18 = arith.constant 0 : index
    %19 = vector.load %arg7[%c0_17, %c0_18] : memref<4x16xf32, #tpu.memory_space<vmem>>, vector<4x16xf32>
    tpu.vector_store %arg7[%c0_17, %c0_18], %18 {strides = array<i32>} : memref<4x16xf32, #tpu.memory_space<vmem>>, vector<4x16xf32>,
    %20 = vector.extract_strided_slice %6 {offsets = [0, 0, 0], sizes = [1, 16, 32], strides = [1, 1, 1]} : vector<4x16x32xbf16> to vector<1x16x32xbf16>
    %21 = vector.shape_cast %20 : vector<1x16x32xbf16> to vector<16x32xbf16>
    %cst_19 = arith.constant dense<0.000000e+00> : vector<16x32xf32>
    %22 = tpu.matmul %7, %21, %cst_19 {dimension_numbers = #tpu.dot_dimension_numbers<[1], [0], [0], [1], [0, 0, 1, 1], [], []>} : vector<16x16xbf16>, vector<16x32xbf16>, vector<16x32xf32> -> vector<16x32xf32>
    %23 = vector.shape_cast %22 : vector<16x32xf32> to vector<1x16x32xf32>
    %24 = vector.extract_strided_slice %6 {offsets = [1, 0, 0], sizes = [1, 16, 32], strides = [1, 1, 1]} : vector<4x16x32xbf16> to vector<1x16x32xbf16>
    %25 = vector.shape_cast %24 : vector<1x16x32xbf16> to vector<16x32xbf16>
    %cst_20 = arith.constant dense<0.000000e+00> : vector<16x32xf32>
    %26 = tpu.matmul %7, %25, %cst_20 {dimension_numbers = #tpu.dot_dimension_numbers<[1], [0], [0], [1], [0, 0, 1, 1], [], []>} : vector<16x16xbf16>, vector<16x32xbf16>, vector<16x32xf32> -> vector<16x32xf32>
    %27 = vector.shape_cast %26 : vector<16x32xf32> to vector<1x16x32xf32>
    %28 = vector.extract_strided_slice %6 {offsets = [2, 0, 0], sizes = [1, 16, 32], strides = [1, 1, 1]} : vector<4x16x32xbf16> to vector<1x16x32xbf16>
    %29 = vector.shape_cast %28 : vector<1x16x32xbf16> to vector<16x32xbf16>
    %cst_21 = arith.constant dense<0.000000e+00> : vector<16x32xf32>
    %30 = tpu.matmul %7, %29, %cst_21 {dimension_numbers = #tpu.dot_dimension_numbers<[1], [0], [0], [1], [0, 0, 1, 1], [], []>} : vector<16x16xbf16>, vector<16x32xbf16>, vector<16x32xf32> -> vector<16x32xf32>
    %31 = vector.shape_cast %30 : vector<16x32xf32> to vector<1x16x32xf32>
    %32 = vector.extract_strided_slice %6 {offsets = [3, 0, 0], sizes = [1, 16, 32], strides = [1, 1, 1]} : vector<4x16x32xbf16> to vector<1x16x32xbf16>
    %33 = vector.shape_cast %32 : vector<1x16x32xbf16> to vector<16x32xbf16>
    %cst_22 = arith.constant dense<0.000000e+00> : vector<16x32xf32>
    %34 = tpu.matmul %7, %33, %cst_22 {dimension_numbers = #tpu.dot_dimension_numbers<[1], [0], [0], [1], [0, 0, 1, 1], [], []>} : vector<16x16xbf16>, vector<16x32xbf16>, vector<16x32xf32> -> vector<16x32xf32>
    %35 = vector.shape_cast %34 : vector<16x32xf32> to vector<1x16x32xf32>
    %36 = tpu.concatenate %23, %27, %31, %35 in 0 : vector<1x16x32xf32>, vector<1x16x32xf32>, vector<1x16x32xf32>, vector<1x16x32xf32> -> vector<4x16x32xf32>
    %c0_23 = arith.constant 0 : index
    %c0_24 = arith.constant 0 : index
    %37 = vector.load %arg8[%c0_23, %c0_24] : memref<4x16xf32, #tpu.memory_space<vmem>>, vector<4x16xf32>
    %38 = arith.extf %4 : vector<4x16x32xbf16> to vector<4x16x32xf32>
    %39 = arith.mulf %38, %36 : vector<4x16x32xf32>
    %cst_25 = arith.constant dense<0.000000e+00> : vector<4x16xf32>
    %40 = vector.multi_reduction <add>, %39, %cst_25 [2] : vector<4x16x32xf32> to vector<4x16xf32>
    %41 = arith.addf %37, %40 : vector<4x16xf32>
    %c0_26 = arith.constant 0 : index
    %c0_27 = arith.constant 0 : index
    %42 = vector.load %arg8[%c0_26, %c0_27] : memref<4x16xf32, #tpu.memory_space<vmem>>, vector<4x16xf32>
    tpu.vector_store %arg8[%c0_26, %c0_27], %41 {strides = array<i32>} : memref<4x16xf32, #tpu.memory_space<vmem>>, vector<4x16xf32>,
    %c0_i32_28 = arith.constant 0 : i32
    %43 = arith.cmpi eq, %arg2, %c0_i32_28 : i32
    %44 = arith.extui %43 : i1 to i32
    %c0_i32_29 = arith.constant 0 : i32
    %45 = arith.cmpi ne, %44, %c0_i32_29 : i32
    scf.if %45 {
      %c0_30 = arith.constant 0 : index
      %c0_31 = arith.constant 0 : index
      %46 = vector.load %arg7[%c0_30, %c0_31] : memref<4x16xf32, #tpu.memory_space<vmem>>, vector<4x16xf32>
      %c0_32 = arith.constant 0 : index
      %c0_33 = arith.constant 0 : index
      %47 = vector.load %arg8[%c0_32, %c0_33] : memref<4x16xf32, #tpu.memory_space<vmem>>, vector<4x16xf32>
      %cst_34 = arith.constant 6.250000e-02 : f32
      %48 = vector.broadcast %cst_34 : f32 to vector<4x16xf32>
      %49 = arith.mulf %47, %48 : vector<4x16xf32>
      %50 = arith.subf %46, %49 : vector<4x16xf32>
      %c0_35 = arith.constant 0 : index
      %c0_36 = arith.constant 0 : index
      %c0_37 = arith.constant 0 : index
      %c0_38 = arith.constant 0 : index
      %51 = vector.load %arg6[%c0_35, %c0_36, %c0_37, %c0_38] : memref<1x1x4x16xf32, #tpu.memory_space<vmem>>, vector<1x1x4x16xf32>
      %52 = vector.shape_cast %51 : vector<1x1x4x16xf32> to vector<4x16xf32>
      %53 = vector.shape_cast %50 : vector<4x16xf32> to vector<1x1x4x16xf32>
      tpu.vector_store %arg6[%c0_35, %c0_36, %c0_37, %c0_38], %53 {strides = array<i32>} : memref<1x1x4x16xf32, #tpu.memory_space<vmem>>, vector<1x1x4x16xf32>,
    } else {
    }
    return
  }
  func.func @transform_0(%arg0: i32, %arg1: i32, %arg2: i32) -> (i32, i32, i32, i32, i32) {
    %c0_i32 = arith.constant 0 : i32
    %c0_i32_0 = arith.constant 0 : i32
    %c0_i32_1 = arith.constant 0 : i32
    %c0_i32_2 = arith.constant 0 : i32
    return %arg0, %arg1, %c0_i32, %c0_i32_0, %c0_i32_1 : i32, i32, i32, i32, i32
  }
  func.func @transform_1(%arg0: i32, %arg1: i32, %arg2: i32) -> (i32, i32, i32, i32, i32) {
    %c0_i32 = arith.constant 0 : i32
    %c0_i32_0 = arith.constant 0 : i32
    %c0_i32_1 = arith.constant 0 : i32
    return %arg0, %arg1, %c0_i32, %arg2, %c0_i32_0 : i32, i32, i32, i32, i32
  }
  func.func @transform_2(%arg0: i32, %arg1: i32, %arg2: i32) -> (i32, i32) {
    %c0_i32 = arith.constant 0 : i32
    %c0_i32_0 = arith.constant 0 : i32
    return %c0_i32, %arg2 : i32, i32
  }
  func.func @transform_3(%arg0: i32, %arg1: i32, %arg2: i32) -> (i32, i32, i32, i32) {
    %c0_i32 = arith.constant 0 : i32
    %c0_i32_0 = arith.constant 0 : i32
    %c0_i32_1 = arith.constant 0 : i32
    return %arg0, %arg1, %c0_i32, %c0_i32_0 : i32, i32, i32, i32
  }
}

</mosaic_0001>

<llo_original>
// kernel: tpu_custom_call.1
$region0: #{tpu_custom_call.1}
  #allocation0 [shape = 'u32[]', space=smem, size = 0x4, offset = 0x4, fixed_abs, tag = 'smem constant byte address 0x4 - core index']
  #allocation1 [shape = 'u32[144,128]{1,0:T(1,128)}', space=vmem, size = 0x12000, scoped, tag = 'internal scratch']
  #allocation2 [shape = 'f32[4,16]{1,0:T(4,128)}', space=vmem, size = 0x800, scoped, tag = 'scratch operand']
  #allocation3 [shape = 'f32[4,16]{1,0:T(4,128)}', space=vmem, size = 0x800, scoped, tag = 'scratch operand']
  %s0 = inlined_call_operand.hbm [shape: bf16[2,1,4,16,32], index: 0, kind: input, shape index: {}]
  %s1 = inlined_call_operand.hbm [shape: bf16[2,1,4,16,32], index: 1, kind: input, shape index: {}]
  %s2 = inlined_call_operand.hbm [shape: bf16[16,16], index: 2, kind: input, shape index: {}]
  %s3 = inlined_call_operand.hbm [shape: f32[2,1,4,16], index: 3, kind: output, shape index: {}]
  %s4 = sld [smem:[#allocation0]]
  $region65: #{tpu_custom_call.1} parent=0
    _
  %s6 = ssub.s32 1, %s4
  %s7 = scalar_select 0, %s6, %s4
  $region1: #{tpu_custom_call.1} parent=0
    #allocation4 [shape = 'u8[32768]{0}', space=vmem, size = 0x8000, scoped, tag = 'input window, operand 0']
    #allocation5 [shape = 's32[2]{0}', space=sflag, size = 0x8, scoped, tag = 'scoped memory for tpu_custom_call.1']
    #allocation6 [shape = 's32[2]{0}', space=sflag, size = 0x8, scoped, tag = 'scoped memory for tpu_custom_call.1']
    #allocation7 [shape = 'u8[32768]{0}', space=vmem, size = 0x8000, scoped, tag = 'input window, operand 1']
    #allocation8 [shape = 's32[2]{0}', space=sflag, size = 0x8, scoped, tag = 'scoped memory for tpu_custom_call.1']
    #allocation9 [shape = 'u8[4096]{0}', space=vmem, size = 0x1000, scoped, tag = 'input window, operand 2, single buffered']
    #allocation10 [shape = 'u8[4096]{0}', space=vmem, size = 0x1000, scoped, tag = 'output window, operand 0']
    %8 = vsyncpa [#allocation5], 0
    %s9 = scalar_lea.sflag [#allocation5], 1
    %10 = vsyncpa %s9, 0
    %11 = vsyncpa [#allocation8], 0
    %s12 = scalar_lea.sflag [#allocation8], 1
    %13 = vsyncpa %s12, 0
    %14 = vsyncpa [#allocation6], 0
    %s15 = scalar_lea.sflag [#allocation6], 1
    %16 = vsyncpa %s15, 0
    loop: start=0, step=1, limit=4
    $region2: #{tpu_custom_call.1} parent=1 // loop_pre_header
      _
    $region3: #{tpu_custom_call.1} parent=1 // loop_header
      %s18 = sphi 0, %s22
      %p19 = scmp.ge.s32.totalorder %s18, 4
      %s25 = sphi 0, %s44
      %s26 = sphi 0, %s40
      %s27 = sphi 0, %s36
      %s28 = sphi 0, %s25
      %s29 = sphi 0, %s26
      %s30 = sphi 0, %s27
      %s31 = sphi 0, %s28
      %s32 = sphi 0, %s29
      %s33 = sphi 0, %s30
      %s49 = sphi 0, %s51
      %s52 = sphi 0, %s49
      %s53 = sphi 0, %s52
      %s69 = sphi 0, %s53
      %s79 = sphi 0, %s81
      %s82 = sphi 0, %s79
      %s83 = sphi 0, %s82
      %s99 = sphi 0, %s83
      %s105 = sphi 0, %s107
      %s108 = sphi 0, %s105
      %s109 = sphi 0, %s108
      %s125 = sphi 0, %s109
      %s133 = sphi 0, %s135
      %s136 = sphi 0, %s133
      %s137 = sphi 0, %s136
      %s153 = sphi 0, %s137
    $region4: #{tpu_custom_call.1} parent=1 // loop_header_branch
      %21 = sbr.rel (%p19) target = $region8
    $region5: #{tpu_custom_call.1} parent=1 // loop_body
      %s23 = ssub.s32 %s18, 1
      %s24 = ssub.s32 %s18, 2
      %s34 = sadd.s32 1, %s27
      %p35 = scmp.ge.s32.totalorder %s34, 1
      %s36 = scalar_select %p35, 0, %s34
      %s37 = sadd.s32 1, %s26
      %s38 = scalar_select %p35, %s37, %s26
      %p39 = scmp.ge.s32.totalorder %s38, 1
      %s40 = scalar_select %p39, 0, %s38
      %s41 = sadd.s32 1, %s25
      %s42 = scalar_select %p39, %s41, %s25
      %p43 = scmp.ge.s32.totalorder %s42, 2
      %s44 = scalar_select %p43, 0, %s42
      %s45 = ssub.s32 %s25, %s44
      %s46 = ssub.s32 %s26, %s40
      %s47 = sor.u32 %s45, %s46
      %p48 = scmp.eq.s32.totalorder %s47, 0
      %s50 = sadd.s32 %s49, 1
      %s51 = scalar_select %p48, %s49, %s50
      %p54 = pneg %p48
      %p55 = scmp.eq.s32.totalorder %s18, 1
      %p56 = por %p54, %p55
      %p57 = scmp.ne.s32.totalorder %s49, %s52
      %p58 = scmp.eq.s32.totalorder %s18, 0
      %p59 = por %p57, %p58
      %p60 = scmp.ne.s32.totalorder %s49, %s52
      %p61 = scmp.eq.s32.totalorder %s23, 1
      %p62 = por %p60, %p61
      %p63 = scmp.ne.s32.totalorder %s52, %s53
      %p64 = scmp.eq.s32.totalorder %s23, 0
      %p65 = por %p63, %p64
      %p66 = scmp.ne.s32.totalorder %s52, %s53
      %p67 = scmp.eq.s32.totalorder %s24, 1
      %p68 = por %p66, %p67
      %p70 = scmp.ne.s32.totalorder %s53, %s69
      %p71 = scmp.eq.s32.totalorder %s24, 0
      %p72 = por %p70, %p71
      %s73 = ssub.s32 %s25, %s44
      %s74 = ssub.s32 %s26, %s40
      %s75 = sor.u32 %s73, %s74
      %s76 = ssub.s32 %s27, %s36
      %s77 = sor.u32 %s75, %s76
      %p78 = scmp.eq.s32.totalorder %s77, 0
      %s80 = sadd.s32 %s79, 1
      %s81 = scalar_select %p78, %s79, %s80
      %p84 = pneg %p78
      %p85 = scmp.eq.s32.totalorder %s18, 1
      %p86 = por %p84, %p85
      %p87 = scmp.ne.s32.totalorder %s79, %s82
      %p88 = scmp.eq.s32.totalorder %s18, 0
      %p89 = por %p87, %p88
      %p90 = scmp.ne.s32.totalorder %s79, %s82
      %p91 = scmp.eq.s32.totalorder %s23, 1
      %p92 = por %p90, %p91
      %p93 = scmp.ne.s32.totalorder %s82, %s83
      %p94 = scmp.eq.s32.totalorder %s23, 0
      %p95 = por %p93, %p94
      %p96 = scmp.ne.s32.totalorder %s82, %s83
      %p97 = scmp.eq.s32.totalorder %s24, 1
      %p98 = por %p96, %p97
      %p100 = scmp.ne.s32.totalorder %s83, %s99
      %p101 = scmp.eq.s32.totalorder %s24, 0
      %p102 = por %p100, %p101
      %s103 = ssub.s32 %s27, %s36
      %p104 = scmp.eq.s32.totalorder %s103, 0
      %s106 = sadd.s32 %s105, 1
      %s107 = scalar_select %p104, %s105, %s106
      %p110 = pneg %p104
      %p111 = scmp.eq.s32.totalorder %s18, 1
      %p112 = por %p110, %p111
      %p113 = scmp.ne.s32.totalorder %s105, %s108
      %p114 = scmp.eq.s32.totalorder %s18, 0
      %p115 = por %p113, %p114
      %p116 = scmp.ne.s32.totalorder %s105, %s108
      %p117 = scmp.eq.s32.totalorder %s23, 1
      %p118 = por %p116, %p117
      %p119 = scmp.ne.s32.totalorder %s108, %s109
      %p120 = scmp.eq.s32.totalorder %s23, 0
      %p121 = por %p119, %p120
      %p122 = scmp.ne.s32.totalorder %s108, %s109
      %p123 = scmp.eq.s32.totalorder %s24, 1
      %p124 = por %p122, %p123
      %p126 = scmp.ne.s32.totalorder %s109, %s125
      %p127 = scmp.eq.s32.totalorder %s24, 0
      %p128 = por %p126, %p127
      %s129 = ssub.s32 %s25, %s44
      %s130 = ssub.s32 %s26, %s40
      %s131 = sor.u32 %s129, %s130
      %p132 = scmp.eq.s32.totalorder %s131, 0
      %s134 = sadd.s32 %s133, 1
      %s135 = scalar_select %p132, %s133, %s134
      %p138 = pneg %p132
      %p139 = scmp.eq.s32.totalorder %s18, 1
      %p140 = por %p138, %p139
      %p141 = scmp.ne.s32.totalorder %s133, %s136
      %p142 = scmp.eq.s32.totalorder %s18, 0
      %p143 = por %p141, %p142
      %p144 = scmp.ne.s32.totalorder %s133, %s136
      %p145 = scmp.eq.s32.totalorder %s23, 1
      %p146 = por %p144, %p145
      %p147 = scmp.ne.s32.totalorder %s136, %s137
      %p148 = scmp.eq.s32.totalorder %s23, 0
      %p149 = por %p147, %p148
      %p150 = scmp.ne.s32.totalorder %s136, %s137
      %p151 = scmp.eq.s32.totalorder %s24, 1
      %p152 = por %p150, %p151
      %p154 = scmp.ne.s32.totalorder %s137, %s153
      %p155 = scmp.eq.s32.totalorder %s24, 0
      %p156 = por %p154, %p155
      %p157 = scmp.le.s32.totalorder 1, %s18
      %p158 = scmp.lt.s32.totalorder %s18, 3
      %p159 = pnand %p157, %p158
      %p160 = pneg %p159
      // Predicated region
      $region9: #{tpu_custom_call.1} parent=5 // pred_check
        _
      $region10: #{tpu_custom_call.1} parent=5 // pred_check_branch
        %162 = sbr.rel (%p159) target = $region12
      $region11: #{tpu_custom_call.1} parent=5 // pred_region
        %s163 = ssub.s32 %s18, 1
        // Predicated region
        $region13: #{tpu_custom_call.1} parent=11 // pred_check
          %p164 = pneg %p121
        $region14: #{tpu_custom_call.1} parent=11 // pred_check_branch
          %166 = sbr.rel (%p164) target = $region16
        $region15: #{tpu_custom_call.1} parent=11 // pred_region
          %s168 = ssub.s32 128, 128
          %169 = vsyncadd [#allocation8], %s168
          %s170 = smul.addr %s30, 64
          %s171 = scalar_lea.hbm %s2, %s170
          %s172 = sshll.u32 [#allocation9], 4
          %s173 = int_to_ptr.vmem [resolvable:$true] %s172
          %178 = dma.hbm_to_vmem [thread:$0]  %s171, 128, %s173, [#allocation8], 64, 64, 4
        $region16: #{tpu_custom_call.1} parent=11 // pred_fallthru
          _
      $region12: #{tpu_custom_call.1} parent=5 // pred_fallthru
        _
      %p179 = scmp.lt.s32.totalorder %s18, 2
      // Predicated region
      $region17: #{tpu_custom_call.1} parent=5 // pred_check
        %p180 = pneg %p179
      $region18: #{tpu_custom_call.1} parent=5 // pred_check_branch
        %182 = sbr.rel (%p180) target = $region20
      $region19: #{tpu_custom_call.1} parent=5 // pred_region
        // Predicated region
        $region21: #{tpu_custom_call.1} parent=19 // pred_check
          %p183 = pneg %p59
        $region22: #{tpu_custom_call.1} parent=19 // pred_check_branch
          %185 = sbr.rel (%p183) target = $region24
        $region23: #{tpu_custom_call.1} parent=19 // pred_region
          %s186 = sand.u32 %s49, 1
          %s187 = scalar_lea.sflag [#allocation5], %s186
          %s188 = sand.u32 %s49, 1
          %s189 = smul.addr %s188, 32
          %s190 = scalar_lea.vmem [#allocation4], %s189
          %s192 = ssub.s32 512, 512
          %193 = vsyncadd %s187, %s192
          %s194 = smul.addr %s26, 8
          %s195 = smul.addr %s25, 8
          %s196 = sadd.s32 %s194, %s195
          %s197 = smul.addr %s196, 64
          %s198 = scalar_lea.hbm %s0, %s197
          %s199 = sshll.u32 %s190, 4
          %s200 = int_to_ptr.vmem [resolvable:$true] %s199
          %205 = dma.hbm_to_vmem [thread:$0]  %s198, 512, %s200, %s187, 64, 64, 4
        $region24: #{tpu_custom_call.1} parent=19 // pred_fallthru
          _
        // Predicated region
        $region25: #{tpu_custom_call.1} parent=19 // pred_check
          %p206 = pneg %p89
        $region26: #{tpu_custom_call.1} parent=19 // pred_check_branch
          %208 = sbr.rel (%p206) target = $region28
        $region27: #{tpu_custom_call.1} parent=19 // pred_region
          %s209 = sand.u32 %s18, 1
          %s210 = scalar_lea.sflag [#allocation8], %s209
          %s211 = sand.u32 %s79, 1
          %s212 = smul.addr %s211, 32
          %s213 = scalar_lea.vmem [#allocation7], %s212
          %s214 = smul.u32 2, %s27
          %s216 = ssub.s32 512, 512
          %217 = vsyncadd %s210, %s216
          %s218 = smul.addr %s26, 8
          %s219 = sadd.s32 %s214, %s218
          %s220 = smul.addr %s25, 8
          %s221 = sadd.s32 %s219, %s220
          %s222 = smul.addr %s221, 64
          %s223 = scalar_lea.hbm %s1, %s222
          %s224 = sshll.u32 %s213, 4
          %s225 = int_to_ptr.vmem [resolvable:$true] %s224
          %230 = dma.hbm_to_vmem [thread:$0]  %s223, 512, %s225, %s210, 64, 64, 4
        $region28: #{tpu_custom_call.1} parent=19 // pred_fallthru
          _
      $region20: #{tpu_custom_call.1} parent=5 // pred_fallthru
        _
      %p231 = scmp.le.s32.totalorder 1, %s18
      %p232 = scmp.lt.s32.totalorder %s18, 3
      %p233 = pnand %p231, %p232
      %p234 = pneg %p233
      // Predicated region
      $region29: #{tpu_custom_call.1} parent=5 // pred_check
        _
      $region30: #{tpu_custom_call.1} parent=5 // pred_check_branch
        %236 = sbr.rel (%p233) target = $region32
      $region31: #{tpu_custom_call.1} parent=5 // pred_region
        %s237 = ssub.s32 %s18, 1
        %s238 = sand.u32 %s52, 1
        %s239 = scalar_lea.sflag [#allocation5], %s238
        %s240 = sand.u32 %s52, 1
        %s241 = smul.addr %s240, 32
        %s242 = scalar_lea.vmem [#allocation4], %s241
        // Predicated region
        $region33: #{tpu_custom_call.1} parent=31 // pred_check
          %p243 = pneg %p65
        $region34: #{tpu_custom_call.1} parent=31 // pred_check_branch
          %245 = sbr.rel (%p243) target = $region36
        $region35: #{tpu_custom_call.1} parent=31 // pred_region
          %246 = dma.done %s239, 512
        $region36: #{tpu_custom_call.1} parent=31 // pred_fallthru
          _
        %s247 = sand.u32 %s23, 1
        %s248 = scalar_lea.sflag [#allocation8], %s247
        %s249 = sand.u32 %s82, 1
        %s250 = smul.addr %s249, 32
        %s251 = scalar_lea.vmem [#allocation7], %s250
        // Predicated region
        $region37: #{tpu_custom_call.1} parent=31 // pred_check
          %p252 = pneg %p95
        $region38: #{tpu_custom_call.1} parent=31 // pred_check_branch
          %254 = sbr.rel (%p252) target = $region40
        $region39: #{tpu_custom_call.1} parent=31 // pred_region
          %255 = dma.done %s248, 512
        $region40: #{tpu_custom_call.1} parent=31 // pred_fallthru
          _
        // Predicated region
        $region41: #{tpu_custom_call.1} parent=31 // pred_check
          %p256 = pneg %p121
        $region42: #{tpu_custom_call.1} parent=31 // pred_check_branch
          %258 = sbr.rel (%p256) target = $region44
        $region43: #{tpu_custom_call.1} parent=31 // pred_region
          %259 = dma.done [#allocation8], 128
        $region44: #{tpu_custom_call.1} parent=31 // pred_fallthru
          _
        %s260 = sand.u32 %s52, 1
        %s261 = scalar_lea.sflag [#allocation5], %s260
        %s262 = sand.u32 %s52, 1
        %s263 = smul.addr %s262, 32
        %s264 = scalar_lea.vmem [#allocation4], %s263
        %p265 = pneg %p65
        %p266 = pneg %p62
        %s267 = sand.u32 %s23, 1
        %s268 = scalar_lea.sflag [#allocation8], %s267
        %s269 = sand.u32 %s82, 1
        %s270 = smul.addr %s269, 32
        %s271 = scalar_lea.vmem [#allocation7], %s270
        %p272 = pneg %p95
        %p273 = pneg %p92
        %p274 = pneg %p121
        %p275 = pneg %p118
        %p276 = pneg %p149
        %p277 = pneg %p146
        %s278 = sand.u32 %s136, 1
        %s279 = scalar_lea.sflag [#allocation6], %s278
        %s280 = sand.u32 %s136, 1
        %s281 = smul.addr %s280, 4
        %s282 = scalar_lea.vmem [#allocation10], %s281
        %s283 = smul.u32 2, %s30
        %p287 = scmp.eq.s32.totalorder %s30, 0
        // Predicated region
        $region45: #{tpu_custom_call.1} parent=31 // pred_check
          %p288 = pneg %p287
        $region46: #{tpu_custom_call.1} parent=31 // pred_check_branch
          %290 = sbr.rel (%p288) target = $region48
        $region47: #{tpu_custom_call.1} parent=31 // pred_region
          %vm291 = vcmask 125952
          %292 = vst.msk [vmem:[#allocation2] sm:$0xf] %vm291, -1e+30
          %293 = vst.msk [vmem:[#allocation3] sm:$0xf] %vm291, 0.0
        $region48: #{tpu_custom_call.1} parent=31 // pred_fallthru
          _
        %v294 = vld [vmem:[%s242] sm:$0xf]
        %v295 = vld [vmem:[%s242 + $0x4] sm:$0xf]
        %v296 = vld [vmem:[%s242 + $0x8] sm:$0xf]
        %v297 = vld [vmem:[%s242 + $0xc] sm:$0xf]
        %v298 = vld [vmem:[%s242 + $0x10] sm:$0xf]
        %v299 = vld [vmem:[%s242 + $0x14] sm:$0xf]
        %v300 = vld [vmem:[%s242 + $0x18] sm:$0xf]
        %v301 = vld [vmem:[%s242 + $0x1c] sm:$0xf]
        %v302 = vld [vmem:[%s251] sm:$0xf]
        %v303 = vld [vmem:[%s251 + $0x4] sm:$0xf]
        %v304 = vld [vmem:[%s251 + $0x8] sm:$0xf]
        %v305 = vld [vmem:[%s251 + $0xc] sm:$0xf]
        %v306 = vld [vmem:[%s251 + $0x10] sm:$0xf]
        %v307 = vld [vmem:[%s251 + $0x14] sm:$0xf]
        %v308 = vld [vmem:[%s251 + $0x18] sm:$0xf]
        %v309 = vld [vmem:[%s251 + $0x1c] sm:$0xf]
        %v310 = vld [vmem:[#allocation9] sm:$0xf]
        %v311 = vld [vmem:[#allocation9 + $0x4] sm:$0xf]
        %v314 = vunpack.c.l.b16 %v294
        %v315 = vunpack.c.l.b16 %v295
        %v316 = vpack.c.b16 %v315, %v314
        %v319 = vunpack.c.l.b16 %v302
        %v320 = vunpack.c.l.b16 %v303
        %v321 = vpack.c.b16 %v320, %v319
        %vm322 = vcmask 261120
        %v324 = vsel %vm322, %v316, 0
        %v327 = vsel %vm322, %v321, 0
        %329 = vmatprep.subr.bf16.mxu0 0
        %330 = vmatpush1.bf16.xpose.msra.mxu0 %v327
        %331 = vmatprep.subr.bf16.mxu0 0
        %332 = vmatpush1.bf16.xpose.msra.mxu0 0
        %333 = vmatprep.subr.bf16.mxu0 0
        %334 = vmatpush1.bf16.xpose.msra.mxu0 0
        %335 = vmatprep.subr.bf16.mxu0 0
        %336 = vmatpush1.bf16.xpose.msra.mxu0 0
        %337 = vmatprep.subr.bf16.mxu0 0
        %338 = vmatpush1.bf16.xpose.msra.mxu0 0
        %339 = vmatprep.subr.bf16.mxu0 0
        %340 = vmatpush1.bf16.xpose.msra.mxu0 0
        %341 = vmatprep.subr.bf16.mxu0 0
        %342 = vmatpush1.bf16.xpose.msra.mxu0 0
        %343 = vmatprep.subr.bf16.mxu0 0
        %344 = vmatpush1.bf16.xpose.msra.mxu0 0
        %345 = vmatprep.subr.bf16.mxu0 0
        %346 = vmatpush1.bf16.xpose.msra.mxu0 0
        %347 = vmatprep.subr.bf16.mxu0 0
        %348 = vmatpush1.bf16.xpose.msra.mxu0 0
        %349 = vmatprep.subr.bf16.mxu0 0
        %350 = vmatpush1.bf16.xpose.msra.mxu0 0
        %351 = vmatprep.subr.bf16.mxu0 0
        %352 = vmatpush1.bf16.xpose.msra.mxu0 0
        %353 = vmatprep.subr.bf16.mxu0 0
        %354 = vmatpush1.bf16.xpose.msra.mxu0 0
        %355 = vmatprep.subr.bf16.mxu0 0
        %356 = vmatpush1.bf16.xpose.msra.mxu0 0
        %357 = vmatprep.subr.bf16.mxu0 0
        %358 = vmatpush1.bf16.xpose.msra.mxu0 0
        %359 = vmatprep.subr.bf16.mxu0 0
        %360 = vmatpush1.bf16.xpose.msra.mxu0 0
        %361 = vmatprep.mubr.bf16.mxu0 0
        %362 = vmatmul.mubr.bf16.gmra.mrb[0].mxu0 %v324
        %v363 = vpop.f32.mrb[0].mxu0
        %v364 = vadd.f32 0.0, %v363
        %v365 = vpop.f32.mrb[0].mxu0
        %v366 = vpop.f32.mrb[0].mxu0
        %v367 = vadd.f32 0.0, %v366
        %v368 = vpop.f32.mrb[0].mxu0
        %369 = vdwg.mxu0
        %v372 = vunpack.c.l.b16 %v296
        %v373 = vunpack.c.l.b16 %v297
        %v374 = vpack.c.b16 %v373, %v372
        %v377 = vunpack.c.l.b16 %v304
        %v378 = vunpack.c.l.b16 %v305
        %v379 = vpack.c.b16 %v378, %v377
        %v381 = vsel %vm322, %v374, 0
        %v384 = vsel %vm322, %v379, 0
        %386 = vmatprep.subr.bf16.mxu0 0
        %387 = vmatpush1.bf16.xpose.msra.mxu0 %v384
        %388 = vmatprep.subr.bf16.mxu0 0
        %389 = vmatpush1.bf16.xpose.msra.mxu0 0
        %390 = vmatprep.subr.bf16.mxu0 0
        %391 = vmatpush1.bf16.xpose.msra.mxu0 0
        %392 = vmatprep.subr.bf16.mxu0 0
        %393 = vmatpush1.bf16.xpose.msra.mxu0 0
        %394 = vmatprep.subr.bf16.mxu0 0
        %395 = vmatpush1.bf16.xpose.msra.mxu0 0
        %396 = vmatprep.subr.bf16.mxu0 0
        %397 = vmatpush1.bf16.xpose.msra.mxu0 0
        %398 = vmatprep.subr.bf16.mxu0 0
        %399 = vmatpush1.bf16.xpose.msra.mxu0 0
        %400 = vmatprep.subr.bf16.mxu0 0
        %401 = vmatpush1.bf16.xpose.msra.mxu0 0
        %402 = vmatprep.subr.bf16.mxu0 0
        %403 = vmatpush1.bf16.xpose.msra.mxu0 0
        %404 = vmatprep.subr.bf16.mxu0 0
        %405 = vmatpush1.bf16.xpose.msra.mxu0 0
        %406 = vmatprep.subr.bf16.mxu0 0
        %407 = vmatpush1.bf16.xpose.msra.mxu0 0
        %408 = vmatprep.subr.bf16.mxu0 0
        %409 = vmatpush1.bf16.xpose.msra.mxu0 0
        %410 = vmatprep.subr.bf16.mxu0 0
        %411 = vmatpush1.bf16.xpose.msra.mxu0 0
        %412 = vmatprep.subr.bf16.mxu0 0
        %413 = vmatpush1.bf16.xpose.msra.mxu0 0
        %414 = vmatprep.subr.bf16.mxu0 0
        %415 = vmatpush1.bf16.xpose.msra.mxu0 0
        %416 = vmatprep.subr.bf16.mxu0 0
        %417 = vmatpush1.bf16.xpose.msra.mxu0 0
        %418 = vmatprep.mubr.bf16.mxu0 0
        %419 = vmatmul.mubr.bf16.gmra.mrb[0].mxu0 %v381
        %v420 = vpop.f32.mrb[0].mxu0
        %v421 = vadd.f32 0.0, %v420
        %v422 = vpop.f32.mrb[0].mxu0
        %v423 = vpop.f32.mrb[0].mxu0
        %v424 = vadd.f32 0.0, %v423
        %v425 = vpop.f32.mrb[0].mxu0
        %426 = vdwg.mxu0
        %v429 = vunpack.c.l.b16 %v298
        %v430 = vunpack.c.l.b16 %v299
        %v431 = vpack.c.b16 %v430, %v429
        %v434 = vunpack.c.l.b16 %v306
        %v435 = vunpack.c.l.b16 %v307
        %v436 = vpack.c.b16 %v435, %v434
        %v438 = vsel %vm322, %v431, 0
        %v441 = vsel %vm322, %v436, 0
        %443 = vmatprep.subr.bf16.mxu0 0
        %444 = vmatpush1.bf16.xpose.msra.mxu0 %v441
        %445 = vmatprep.subr.bf16.mxu0 0
        %446 = vmatpush1.bf16.xpose.msra.mxu0 0
        %447 = vmatprep.subr.bf16.mxu0 0
        %448 = vmatpush1.bf16.xpose.msra.mxu0 0
        %449 = vmatprep.subr.bf16.mxu0 0
        %450 = vmatpush1.bf16.xpose.msra.mxu0 0
        %451 = vmatprep.subr.bf16.mxu0 0
        %452 = vmatpush1.bf16.xpose.msra.mxu0 0
        %453 = vmatprep.subr.bf16.mxu0 0
        %454 = vmatpush1.bf16.xpose.msra.mxu0 0
        %455 = vmatprep.subr.bf16.mxu0 0
        %456 = vmatpush1.bf16.xpose.msra.mxu0 0
        %457 = vmatprep.subr.bf16.mxu0 0
        %458 = vmatpush1.bf16.xpose.msra.mxu0 0
        %459 = vmatprep.subr.bf16.mxu0 0
        %460 = vmatpush1.bf16.xpose.msra.mxu0 0
        %461 = vmatprep.subr.bf16.mxu0 0
        %462 = vmatpush1.bf16.xpose.msra.mxu0 0
        %463 = vmatprep.subr.bf16.mxu0 0
        %464 = vmatpush1.bf16.xpose.msra.mxu0 0
        %465 = vmatprep.subr.bf16.mxu0 0
        %466 = vmatpush1.bf16.xpose.msra.mxu0 0
        %467 = vmatprep.subr.bf16.mxu0 0
        %468 = vmatpush1.bf16.xpose.msra.mxu0 0
        %469 = vmatprep.subr.bf16.mxu0 0
        %470 = vmatpush1.bf16.xpose.msra.mxu0 0
        %471 = vmatprep.subr.bf16.mxu0 0
        %472 = vmatpush1.bf16.xpose.msra.mxu0 0
        %473 = vmatprep.subr.bf16.mxu0 0
        %474 = vmatpush1.bf16.xpose.msra.mxu0 0
        %475 = vmatprep.mubr.bf16.mxu0 0
        %476 = vmatmul.mubr.bf16.gmra.mrb[0].mxu0 %v438
        %v477 = vpop.f32.mrb[0].mxu0
        %v478 = vadd.f32 0.0, %v477
        %v479 = vpop.f32.mrb[0].mxu0
        %v480 = vpop.f32.mrb[0].mxu0
        %v481 = vadd.f32 0.0, %v480
        %v482 = vpop.f32.mrb[0].mxu0
        %483 = vdwg.mxu0
        %v486 = vunpack.c.l.b16 %v300
        %v487 = vunpack.c.l.b16 %v301
        %v488 = vpack.c.b16 %v487, %v486
        %v491 = vunpack.c.l.b16 %v308
        %v492 = vunpack.c.l.b16 %v309
        %v493 = vpack.c.b16 %v492, %v491
        %v495 = vsel %vm322, %v488, 0
        %v498 = vsel %vm322, %v493, 0
        %500 = vmatprep.subr.bf16.mxu0 0
        %501 = vmatpush1.bf16.xpose.msra.mxu0 %v498
        %502 = vmatprep.subr.bf16.mxu0 0
        %503 = vmatpush1.bf16.xpose.msra.mxu0 0
        %504 = vmatprep.subr.bf16.mxu0 0
        %505 = vmatpush1.bf16.xpose.msra.mxu0 0
        %506 = vmatprep.subr.bf16.mxu0 0
        %507 = vmatpush1.bf16.xpose.msra.mxu0 0
        %508 = vmatprep.subr.bf16.mxu0 0
        %509 = vmatpush1.bf16.xpose.msra.mxu0 0
        %510 = vmatprep.subr.bf16.mxu0 0
        %511 = vmatpush1.bf16.xpose.msra.mxu0 0
        %512 = vmatprep.subr.bf16.mxu0 0
        %513 = vmatpush1.bf16.xpose.msra.mxu0 0
        %514 = vmatprep.subr.bf16.mxu0 0
        %515 = vmatpush1.bf16.xpose.msra.mxu0 0
        %516 = vmatprep.subr.bf16.mxu0 0
        %517 = vmatpush1.bf16.xpose.msra.mxu0 0
        %518 = vmatprep.subr.bf16.mxu0 0
        %519 = vmatpush1.bf16.xpose.msra.mxu0 0
        %520 = vmatprep.subr.bf16.mxu0 0
        %521 = vmatpush1.bf16.xpose.msra.mxu0 0
        %522 = vmatprep.subr.bf16.mxu0 0
        %523 = vmatpush1.bf16.xpose.msra.mxu0 0
        %524 = vmatprep.subr.bf16.mxu0 0
        %525 = vmatpush1.bf16.xpose.msra.mxu0 0
        %526 = vmatprep.subr.bf16.mxu0 0
        %527 = vmatpush1.bf16.xpose.msra.mxu0 0
        %528 = vmatprep.subr.bf16.mxu0 0
        %529 = vmatpush1.bf16.xpose.msra.mxu0 0
        %530 = vmatprep.subr.bf16.mxu0 0
        %531 = vmatpush1.bf16.xpose.msra.mxu0 0
        %532 = vmatprep.mubr.bf16.mxu0 0
        %533 = vmatmul.mubr.bf16.gmra.mrb[0].mxu0 %v495
        %v534 = vpop.f32.mrb[0].mxu0
        %v535 = vadd.f32 0.0, %v534
        %v536 = vpop.f32.mrb[0].mxu0
        %v537 = vpop.f32.mrb[0].mxu0
        %v538 = vadd.f32 0.0, %v537
        %v539 = vpop.f32.mrb[0].mxu0
        %540 = vdwg.mxu0
        %vm541 = vcmp.gt.bf16.partialorder %v310, 0
        %vm542 = vcmp.gt.bf16.partialorder %v311, 0
        %v543 = vsel %vm541, 65537, 0
        %v544 = vsel %vm542, 65537, 0
        %v545 = vunpack.c.l.b16 %v543
        %v546 = vunpack.c.l.b16 %v544
        %vm547 = vcmp.ne.s32.totalorder %v545, 0
        %vm548 = vcmp.ne.s32.totalorder %v546, 0
        %v549 = vsel %vm547, 1, 0
        %v550 = vsel %vm548, 1, 0
        %vm551 = vcmp.eq.s32.totalorder %v549, 1
        %vm552 = vcmp.eq.s32.totalorder %v550, 1
        %v553 = vsel %vm551, %v364, -1e+30
        %v554 = vsel %vm552, %v367, -1e+30
        %v555 = vsel %vm551, %v421, -1e+30
        %v556 = vsel %vm552, %v424, -1e+30
        %v557 = vsel %vm551, %v478, -1e+30
        %v558 = vsel %vm552, %v481, -1e+30
        %v559 = vsel %vm551, %v535, -1e+30
        %v560 = vsel %vm552, %v538, -1e+30
        %vm561 = vcmask 130048
        %v562 = vsel %vm561, %v553, -inf
        %563 = vmax.xlane.f32.xlu0 %v562
        %v564 = vpop.xlane.xlu0 %563
        %v565 = vsel %vm561, %v554, -inf
        %566 = vmax.xlane.f32.xlu0 %v565
        %v567 = vpop.xlane.xlu0 %566
        %v568 = vsel %vm561, %v555, -inf
        %569 = vmax.xlane.f32.xlu0 %v568
        %v570 = vpop.xlane.xlu0 %569
        %v571 = vsel %vm561, %v556, -inf
        %572 = vmax.xlane.f32.xlu0 %v571
        %v573 = vpop.xlane.xlu0 %572
        %v574 = vsel %vm561, %v557, -inf
        %575 = vmax.xlane.f32.xlu0 %v574
        %v576 = vpop.xlane.xlu0 %575
        %v577 = vsel %vm561, %v558, -inf
        %578 = vmax.xlane.f32.xlu0 %v577
        %v579 = vpop.xlane.xlu0 %578
        %v580 = vsel %vm561, %v559, -inf
        %581 = vmax.xlane.f32.xlu0 %v580
        %v582 = vpop.xlane.xlu0 %581
        %v583 = vsel %vm561, %v560, -inf
        %584 = vmax.xlane.f32.xlu0 %v583
        %v585 = vpop.xlane.xlu0 %584
        %v586 = vld [vmem:[#allocation2] sm:$0xf]
        %v595 = vlaneseq
        %v596 = vand.u32 %v595, 127
        %v597 = vlaneseq
        %v598 = vshrl.u32 %v597, 7
        %v599 = vsub.s32 %v596, %v598
        %v600 = vrot.slane %v564, %v599
        %v601 = vadd.s32 %v596, 4294967288
        %v602 = vlaneseq
        %v603 = vshrl.u32 %v602, 7
        %v604 = vsub.s32 %v601, %v603
        %v605 = vrot.slane %v567, %v604
        %vm606 = vcmask 130112
        %v607 = vsel %vm606, %v605, %v600
        %v608 = vlaneseq
        %v609 = vshrl.u32 %v608, 7
        %v610 = vsub.s32 %v596, %v609
        %v611 = vrot.slane %v570, %v610
        %v612 = vlaneseq
        %v613 = vshrl.u32 %v612, 7
        %v614 = vsub.s32 %v601, %v613
        %v615 = vrot.slane %v573, %v614
        %v616 = vsel %vm606, %v615, %v611
        %v617 = vlaneseq
        %v618 = vshrl.u32 %v617, 7
        %v619 = vsub.s32 %v596, %v618
        %v620 = vrot.slane %v576, %v619
        %v621 = vlaneseq
        %v622 = vshrl.u32 %v621, 7
        %v623 = vsub.s32 %v601, %v622
        %v624 = vrot.slane %v579, %v623
        %v625 = vsel %vm606, %v624, %v620
        %v626 = vlaneseq
        %v627 = vshrl.u32 %v626, 7
        %v628 = vsub.s32 %v596, %v627
        %v629 = vrot.slane %v582, %v628
        %v630 = vlaneseq
        %v631 = vshrl.u32 %v630, 7
        %v632 = vsub.s32 %v601, %v631
        %v633 = vrot.slane %v585, %v632
        %v634 = vsel %vm606, %v633, %v629
        %vm635 = vcmask 1041409
        %v636 = vsel %vm635, %v616, %v607
        %vm637 = vcmask 1042434
        %v638 = vsel %vm637, %v625, %v636
        %vm639 = vcmask 1043459
        %v640 = vsel %vm639, %v634, %v638
        %v642 = vmax.f32 %v586, %v640
        %vm643 = vcmask 125952
        %644 = vst.msk [vmem:[#allocation2] sm:$0xf] %vm643, %v642
        %v647 = vunpack.c.l.b16 %v310
        %v648 = vunpack.c.l.b16 %v311
        %v649 = vpack.c.b16 %v648, %v647
        %v652 = vsel %vm561, %v649, 0
        %654 = vmatprep.subr.bf16.mxu0 0
        %655 = vmatpush1.bf16.msra.mxu0 %v321
        %656 = vmatprep.subr.bf16.mxu0 0
        %657 = vmatpush1.bf16.msra.mxu0 0
        %658 = vmatprep.subr.bf16.mxu0 0
        %659 = vmatpush1.bf16.msra.mxu0 0
        %660 = vmatprep.subr.bf16.mxu0 0
        %661 = vmatpush1.bf16.msra.mxu0 0
        %662 = vmatprep.subr.bf16.mxu0 0
        %663 = vmatpush1.bf16.msra.mxu0 0
        %664 = vmatprep.subr.bf16.mxu0 0
        %665 = vmatpush1.bf16.msra.mxu0 0
        %666 = vmatprep.subr.bf16.mxu0 0
        %667 = vmatpush1.bf16.msra.mxu0 0
        %668 = vmatprep.subr.bf16.mxu0 0
        %669 = vmatpush1.bf16.msra.mxu0 0
        %670 = vmatprep.subr.bf16.mxu0 0
        %671 = vmatpush1.bf16.msra.mxu0 0
        %672 = vmatprep.subr.bf16.mxu0 0
        %673 = vmatpush1.bf16.msra.mxu0 0
        %674 = vmatprep.subr.bf16.mxu0 0
        %675 = vmatpush1.bf16.msra.mxu0 0
        %676 = vmatprep.subr.bf16.mxu0 0
        %677 = vmatpush1.bf16.msra.mxu0 0
        %678 = vmatprep.subr.bf16.mxu0 0
        %679 = vmatpush1.bf16.msra.mxu0 0
        %680 = vmatprep.subr.bf16.mxu0 0
        %681 = vmatpush1.bf16.msra.mxu0 0
        %682 = vmatprep.subr.bf16.mxu0 0
        %683 = vmatpush1.bf16.msra.mxu0 0
        %684 = vmatprep.subr.bf16.mxu0 0
        %685 = vmatpush1.bf16.msra.mxu0 0
        %686 = vmatprep.mubr.bf16.mxu0 0
        %687 = vmatmul.mubr.bf16.gmra.mrb[0].mxu0 %v652
        %v688 = vpop.f32.mrb[0].mxu0
        %v689 = vadd.f32 0.0, %v688
        %v690 = vpop.f32.mrb[0].mxu0
        %v691 = vpop.f32.mrb[0].mxu0
        %v692 = vadd.f32 0.0, %v691
        %v693 = vpop.f32.mrb[0].mxu0
        %694 = vdwg.mxu0
        %696 = vmatprep.subr.bf16.mxu0 0
        %697 = vmatpush1.bf16.msra.mxu0 %v379
        %698 = vmatprep.subr.bf16.mxu0 0
        %699 = vmatpush1.bf16.msra.mxu0 0
        %700 = vmatprep.subr.bf16.mxu0 0
        %701 = vmatpush1.bf16.msra.mxu0 0
        %702 = vmatprep.subr.bf16.mxu0 0
        %703 = vmatpush1.bf16.msra.mxu0 0
        %704 = vmatprep.subr.bf16.mxu0 0
        %705 = vmatpush1.bf16.msra.mxu0 0
        %706 = vmatprep.subr.bf16.mxu0 0
        %707 = vmatpush1.bf16.msra.mxu0 0
        %708 = vmatprep.subr.bf16.mxu0 0
        %709 = vmatpush1.bf16.msra.mxu0 0
        %710 = vmatprep.subr.bf16.mxu0 0
        %711 = vmatpush1.bf16.msra.mxu0 0
        %712 = vmatprep.subr.bf16.mxu0 0
        %713 = vmatpush1.bf16.msra.mxu0 0
        %714 = vmatprep.subr.bf16.mxu0 0
        %715 = vmatpush1.bf16.msra.mxu0 0
        %716 = vmatprep.subr.bf16.mxu0 0
        %717 = vmatpush1.bf16.msra.mxu0 0
        %718 = vmatprep.subr.bf16.mxu0 0
        %719 = vmatpush1.bf16.msra.mxu0 0
        %720 = vmatprep.subr.bf16.mxu0 0
        %721 = vmatpush1.bf16.msra.mxu0 0
        %722 = vmatprep.subr.bf16.mxu0 0
        %723 = vmatpush1.bf16.msra.mxu0 0
        %724 = vmatprep.subr.bf16.mxu0 0
        %725 = vmatpush1.bf16.msra.mxu0 0
        %726 = vmatprep.subr.bf16.mxu0 0
        %727 = vmatpush1.bf16.msra.mxu0 0
        %728 = vmatprep.mubr.bf16.mxu0 0
        %729 = vmatmul.mubr.bf16.gmra.mrb[0].mxu0 %v652
        %v730 = vpop.f32.mrb[0].mxu0
        %v731 = vadd.f32 0.0, %v730
        %v732 = vpop.f32.mrb[0].mxu0
        %v733 = vpop.f32.mrb[0].mxu0
        %v734 = vadd.f32 0.0, %v733
        %v735 = vpop.f32.mrb[0].mxu0
        %736 = vdwg.mxu0
        %738 = vmatprep.subr.bf16.mxu0 0
        %739 = vmatpush1.bf16.msra.mxu0 %v436
        %740 = vmatprep.subr.bf16.mxu0 0
        %741 = vmatpush1.bf16.msra.mxu0 0
        %742 = vmatprep.subr.bf16.mxu0 0
        %743 = vmatpush1.bf16.msra.mxu0 0
        %744 = vmatprep.subr.bf16.mxu0 0
        %745 = vmatpush1.bf16.msra.mxu0 0
        %746 = vmatprep.subr.bf16.mxu0 0
        %747 = vmatpush1.bf16.msra.mxu0 0
        %748 = vmatprep.subr.bf16.mxu0 0
        %749 = vmatpush1.bf16.msra.mxu0 0
        %750 = vmatprep.subr.bf16.mxu0 0
        %751 = vmatpush1.bf16.msra.mxu0 0
        %752 = vmatprep.subr.bf16.mxu0 0
        %753 = vmatpush1.bf16.msra.mxu0 0
        %754 = vmatprep.subr.bf16.mxu0 0
        %755 = vmatpush1.bf16.msra.mxu0 0
        %756 = vmatprep.subr.bf16.mxu0 0
        %757 = vmatpush1.bf16.msra.mxu0 0
        %758 = vmatprep.subr.bf16.mxu0 0
        %759 = vmatpush1.bf16.msra.mxu0 0
        %760 = vmatprep.subr.bf16.mxu0 0
        %761 = vmatpush1.bf16.msra.mxu0 0
        %762 = vmatprep.subr.bf16.mxu0 0
        %763 = vmatpush1.bf16.msra.mxu0 0
        %764 = vmatprep.subr.bf16.mxu0 0
        %765 = vmatpush1.bf16.msra.mxu0 0
        %766 = vmatprep.subr.bf16.mxu0 0
        %767 = vmatpush1.bf16.msra.mxu0 0
        %768 = vmatprep.subr.bf16.mxu0 0
        %769 = vmatpush1.bf16.msra.mxu0 0
        %770 = vmatprep.mubr.bf16.mxu0 0
        %771 = vmatmul.mubr.bf16.gmra.mrb[0].mxu0 %v652
        %v772 = vpop.f32.mrb[0].mxu0
        %v773 = vadd.f32 0.0, %v772
        %v774 = vpop.f32.mrb[0].mxu0
        %v775 = vpop.f32.mrb[0].mxu0
        %v776 = vadd.f32 0.0, %v775
        %v777 = vpop.f32.mrb[0].mxu0
        %778 = vdwg.mxu0
        %780 = vmatprep.subr.bf16.mxu0 0
        %781 = vmatpush1.bf16.msra.mxu0 %v493
        %782 = vmatprep.subr.bf16.mxu0 0
        %783 = vmatpush1.bf16.msra.mxu0 0
        %784 = vmatprep.subr.bf16.mxu0 0
        %785 = vmatpush1.bf16.msra.mxu0 0
        %786 = vmatprep.subr.bf16.mxu0 0
        %787 = vmatpush1.bf16.msra.mxu0 0
        %788 = vmatprep.subr.bf16.mxu0 0
        %789 = vmatpush1.bf16.msra.mxu0 0
        %790 = vmatprep.subr.bf16.mxu0 0
        %791 = vmatpush1.bf16.msra.mxu0 0
        %792 = vmatprep.subr.bf16.mxu0 0
        %793 = vmatpush1.bf16.msra.mxu0 0
        %794 = vmatprep.subr.bf16.mxu0 0
        %795 = vmatpush1.bf16.msra.mxu0 0
        %796 = vmatprep.subr.bf16.mxu0 0
        %797 = vmatpush1.bf16.msra.mxu0 0
        %798 = vmatprep.subr.bf16.mxu0 0
        %799 = vmatpush1.bf16.msra.mxu0 0
        %800 = vmatprep.subr.bf16.mxu0 0
        %801 = vmatpush1.bf16.msra.mxu0 0
        %802 = vmatprep.subr.bf16.mxu0 0
        %803 = vmatpush1.bf16.msra.mxu0 0
        %804 = vmatprep.subr.bf16.mxu0 0
        %805 = vmatpush1.bf16.msra.mxu0 0
        %806 = vmatprep.subr.bf16.mxu0 0
        %807 = vmatpush1.bf16.msra.mxu0 0
        %808 = vmatprep.subr.bf16.mxu0 0
        %809 = vmatpush1.bf16.msra.mxu0 0
        %810 = vmatprep.subr.bf16.mxu0 0
        %811 = vmatpush1.bf16.msra.mxu0 0
        %812 = vmatprep.mubr.bf16.mxu0 0
        %813 = vmatmul.mubr.bf16.gmra.mrb[0].mxu0 %v652
        %v814 = vpop.f32.mrb[0].mxu0
        %v815 = vadd.f32 0.0, %v814
        %v816 = vpop.f32.mrb[0].mxu0
        %v817 = vpop.f32.mrb[0].mxu0
        %v818 = vadd.f32 0.0, %v817
        %v819 = vpop.f32.mrb[0].mxu0
        %820 = vdwg.mxu0
        %v821 = vld [vmem:[#allocation3] sm:$0xf]
        %v822 = vunpack.c.l.bf16 %v294
        %v823 = vunpack.c.l.bf16 %v295
        %v824 = vunpack.c.l.bf16 %v296
        %v825 = vunpack.c.l.bf16 %v297
        %v826 = vunpack.c.l.bf16 %v298
        %v827 = vunpack.c.l.bf16 %v299
        %v828 = vunpack.c.l.bf16 %v300
        %v829 = vunpack.c.l.bf16 %v301
        %v830 = vmul.f32 %v822, %v689
        %v831 = vmul.f32 %v823, %v692
        %v832 = vmul.f32 %v824, %v731
        %v833 = vmul.f32 %v825, %v734
        %v834 = vmul.f32 %v826, %v773
        %v835 = vmul.f32 %v827, %v776
        %v836 = vmul.f32 %v828, %v815
        %v837 = vmul.f32 %v829, %v818
        %v838 = vsel %vm322, %v830, 0.0
        %839 = vadd.xlane.f32.xlu0 %v838
        %v840 = vpop.xlane.xlu0 %839
        %v841 = vsel %vm322, %v831, 0.0
        %842 = vadd.xlane.f32.xlu0 %v841
        %v843 = vpop.xlane.xlu0 %842
        %v844 = vsel %vm322, %v832, 0.0
        %845 = vadd.xlane.f32.xlu0 %v844
        %v846 = vpop.xlane.xlu0 %845
        %v847 = vsel %vm322, %v833, 0.0
        %848 = vadd.xlane.f32.xlu0 %v847
        %v849 = vpop.xlane.xlu0 %848
        %v850 = vsel %vm322, %v834, 0.0
        %851 = vadd.xlane.f32.xlu0 %v850
        %v852 = vpop.xlane.xlu0 %851
        %v853 = vsel %vm322, %v835, 0.0
        %854 = vadd.xlane.f32.xlu0 %v853
        %v855 = vpop.xlane.xlu0 %854
        %v856 = vsel %vm322, %v836, 0.0
        %857 = vadd.xlane.f32.xlu0 %v856
        %v858 = vpop.xlane.xlu0 %857
        %v859 = vsel %vm322, %v837, 0.0
        %860 = vadd.xlane.f32.xlu0 %v859
        %v861 = vpop.xlane.xlu0 %860
        %v870 = vlaneseq
        %v871 = vshrl.u32 %v870, 7
        %v872 = vsub.s32 %v596, %v871
        %v873 = vrot.slane %v840, %v872
        %v874 = vlaneseq
        %v875 = vshrl.u32 %v874, 7
        %v876 = vsub.s32 %v601, %v875
        %v877 = vrot.slane %v843, %v876
        %v878 = vsel %vm606, %v877, %v873
        %v879 = vlaneseq
        %v880 = vshrl.u32 %v879, 7
        %v881 = vsub.s32 %v596, %v880
        %v882 = vrot.slane %v846, %v881
        %v883 = vlaneseq
        %v884 = vshrl.u32 %v883, 7
        %v885 = vsub.s32 %v601, %v884
        %v886 = vrot.slane %v849, %v885
        %v887 = vsel %vm606, %v886, %v882
        %v888 = vlaneseq
        %v889 = vshrl.u32 %v888, 7
        %v890 = vsub.s32 %v596, %v889
        %v891 = vrot.slane %v852, %v890
        %v892 = vlaneseq
        %v893 = vshrl.u32 %v892, 7
        %v894 = vsub.s32 %v601, %v893
        %v895 = vrot.slane %v855, %v894
        %v896 = vsel %vm606, %v895, %v891
        %v897 = vlaneseq
        %v898 = vshrl.u32 %v897, 7
        %v899 = vsub.s32 %v596, %v898
        %v900 = vrot.slane %v858, %v899
        %v901 = vlaneseq
        %v902 = vshrl.u32 %v901, 7
        %v903 = vsub.s32 %v601, %v902
        %v904 = vrot.slane %v861, %v903
        %v905 = vsel %vm606, %v904, %v900
        %v906 = vsel %vm635, %v887, %v878
        %v907 = vsel %vm637, %v896, %v906
        %v908 = vsel %vm639, %v905, %v907
        %v910 = vadd.f32 %v821, %v908
        %911 = vst.msk [vmem:[#allocation3] sm:$0xf] %vm643, %v910
        // Predicated region
        $region49: #{tpu_custom_call.1} parent=31 // pred_check
          %p912 = pneg %p287
        $region50: #{tpu_custom_call.1} parent=31 // pred_check_branch
          %914 = sbr.rel (%p912) target = $region52
        $region51: #{tpu_custom_call.1} parent=31 // pred_region
          %v915 = vld [vmem:[#allocation2] sm:$0xf]
          %v916 = vld [vmem:[#allocation3] sm:$0xf]
          %v917 = vmul.f32 %v916, 0.0625
          %v918 = vsub.f32 %v915, %v917
          %919 = vst.msk [vmem:[%s282] sm:$0xf] %vm643, %v918
        $region52: #{tpu_custom_call.1} parent=31 // pred_fallthru
          _
        %s920 = sand.u32 %s136, 1
        %s921 = scalar_lea.sflag [#allocation6], %s920
        %s922 = sand.u32 %s136, 1
        %s923 = smul.addr %s922, 4
        %s924 = scalar_lea.vmem [#allocation10], %s923
        // Predicated region
        $region53: #{tpu_custom_call.1} parent=31 // pred_check
          %p925 = pneg %p146
        $region54: #{tpu_custom_call.1} parent=31 // pred_check_branch
          %927 = sbr.rel (%p925) target = $region56
        $region55: #{tpu_custom_call.1} parent=31 // pred_region
          %s929 = ssub.s32 64, 64
          %930 = vsyncadd %s921, %s929
          %s931 = sadd.s32 %s29, %s28
          %s932 = smul.addr %s931, 64
          %s933 = scalar_lea.hbm %s3, %s932
          %s935 = sshll.u32 %s924, 4
          %s936 = int_to_ptr.vmem [resolvable:$true] %s935
          %938 = dma.vmem_to_hbm [thread:$0]  %s936, 64, %s933, %s921
        $region56: #{tpu_custom_call.1} parent=31 // pred_fallthru
          _
      $region32: #{tpu_custom_call.1} parent=5 // pred_fallthru
        _
      %p939 = scmp.le.s32.totalorder 2, %s18
      // Predicated region
      $region57: #{tpu_custom_call.1} parent=5 // pred_check
        %p940 = pneg %p939
      $region58: #{tpu_custom_call.1} parent=5 // pred_check_branch
        %942 = sbr.rel (%p940) target = $region60
      $region59: #{tpu_custom_call.1} parent=5 // pred_region
        %s943 = ssub.s32 %s18, 2
        // Predicated region
        $region61: #{tpu_custom_call.1} parent=59 // pred_check
          %p944 = pneg %p152
        $region62: #{tpu_custom_call.1} parent=59 // pred_check_branch
          %946 = sbr.rel (%p944) target = $region64
        $region63: #{tpu_custom_call.1} parent=59 // pred_region
          %s947 = sand.u32 %s137, 1
          %s948 = scalar_lea.sflag [#allocation6], %s947
          %s949 = sand.u32 %s137, 1
          %s950 = smul.addr %s949, 4
          %s951 = scalar_lea.vmem [#allocation10], %s950
          %952 = dma.done %s948, 64
        $region64: #{tpu_custom_call.1} parent=59 // pred_fallthru
          _
      $region60: #{tpu_custom_call.1} parent=5 // pred_fallthru
        _
    $region6: #{tpu_custom_call.1} parent=1 // loop_footer
      %s22 = sadd.s32 1, %s18
    $region7: #{tpu_custom_call.1} parent=1 // loop_footer_branch
      %17 = sbr.rel target = $region3
    $region8: #{tpu_custom_call.1} parent=1 // loop_exit
      _
    %953 = vsyncpa [#allocation5], 1
    %s954 = scalar_lea.sflag [#allocation5], 1
    %955 = vsyncpa %s954, 1
    %956 = vsyncpa [#allocation8], 1
    %s957 = scalar_lea.sflag [#allocation8], 1
    %958 = vsyncpa %s957, 1
    %959 = vsyncpa [#allocation6], 1
    %s960 = scalar_lea.sflag [#allocation6], 1
    %961 = vsyncpa %s960, 1

</llo_original>
